<compile_context>
chip_gen: v5e
topology: v5e:2x2
jax: 0.10.0
libtpu: 0.0.40
codegen_flags: <defaults>
</compile_context>

<pallas_src>
import functools

import jax
import jax.numpy as jnp
from jax.experimental import pallas as pl
from jax.experimental.pallas import tpu as pltpu

_LANE = 128
_SUBLANE = 8


# ----------------------------- helpers ---------------------------------------


def _round_up(x, m):
    return (x + m - 1) // m * m


def _pad2(a, rows, cols):
    r, c = a.shape
    return jnp.pad(a.astype(jnp.float32), ((0, rows - r), (0, cols - c)))


def _c32(v):
    """Python int -> int32 constant with two's-complement wraparound."""
    v &= 0xFFFFFFFF
    if v >= 0x80000000:
        v -= 0x100000000
    return jnp.int32(v)


def _mix24(x):
    """splitmix-style finisher on int32; returns non-negative 24-bit ints."""
    x = (x ^ jax.lax.shift_right_logical(x, jnp.int32(16))) * _c32(0x7FEB352D)
    x = (x ^ jax.lax.shift_right_logical(x, jnp.int32(15))) * _c32(0x846CA68B)
    x = x ^ jax.lax.shift_right_logical(x, jnp.int32(16))
    return jax.lax.shift_right_logical(x, jnp.int32(8))  # [0, 2^24)


# ----------------------------- fused kernel ----------------------------------


def _mlp2_kernel(*refs, n_hidden, keep_thresh24, keep_scale, eps,
                 use_dropout, true_n, n_pad):
    """refs = [seed(SMEM), x, (w_i, gamma_i, beta_i) * n_hidden, w_last, b_last, out]."""
    seed_ref = refs[0]
    h = refs[1][...]                                   # (N_pad, D0_pad) f32
    idx = 2
    seed = seed_ref[0]                                 # int32 scalar

    inv_n = jnp.float32(1.0 / true_n)

    # Hoisted hash base planes: JAX does not CSE iota/broadcast, so build one
    # combined (row*A + col*B) plane per unique activation shape, outside the
    # unrolled layer loop, and only add a per-layer salt inside it.
    _base_cache = {}

    def _hash_base(shape):
        if shape not in _base_cache:
            r = jax.lax.broadcasted_iota(jnp.int32, shape, 0)
            c = jax.lax.broadcasted_iota(jnp.int32, shape, 1)
            _base_cache[shape] = r * _c32(0x9E3779B1) + c * _c32(0x85EBCA77)
        return _base_cache[shape]

    # Row-validity mask (only when the batch was zero-padded): keeps pad rows
    # identically zero so the NEXT layer's batch statistics stay exact.
    if n_pad:
        row_valid = (
            jax.lax.broadcasted_iota(jnp.int32, (h.shape[0], 1), 0) < true_n
        )

    for i in range(n_hidden):
        w = refs[idx][...]                             # (D_in_pad, D_out_pad)
        gamma = refs[idx + 1][...]                     # (1, D_out_pad)
        beta = refs[idx + 2][...]                      # (1, D_out_pad)
        idx += 3

        # Linear on the MXU in bf16 (f32 accumulation).  Bias omitted: the BN
        # batch-mean subtraction cancels it exactly.
        z = jnp.dot(h.astype(jnp.bfloat16), w.astype(jnp.bfloat16),
                    preferred_element_type=jnp.float32)

        # BatchNorm1d, training-mode statistics (biased variance), per feature.
        # Pad rows of `h` are zero => pad rows of `z` are zero, so sums divided
        # by the TRUE batch size are exact (with a pad-row correction on the
        # centered sum of squares).
        mean = jnp.sum(z, axis=0, keepdims=True) * inv_n
        centered = z - mean
        sq = jnp.sum(centered * centered, axis=0, keepdims=True)
        if n_pad:
            sq = sq - jnp.float32(n_pad) * mean * mean
        var = sq * inv_n

        # gamma and the dropout survivor scale 1/(1-p) folded into the BN
        # affine (row-vector ops, essentially free; commutes with ReLU).
        scale = gamma * jax.lax.rsqrt(var + eps)
        shift = beta
        if use_dropout:
            scale = scale * keep_scale
            shift = shift * keep_scale

        y = jnp.maximum(centered * scale + shift, 0.0)  # ReLU

        # Dropout(p): integer-domain compare against a precomputed threshold.
        if use_dropout:
            salt = seed + _c32((i + 1) * 0x9E3779B9)
            bits = _mix24(_hash_base(y.shape) + salt)   # [0, 2^24)
            keep = bits >= jnp.int32(keep_thresh24)     # P(keep) = 1 - p
            y = jnp.where(keep, y, 0.0)

        if n_pad:
            y = jnp.where(row_valid, y, 0.0)            # keep pad rows at zero

        h = y

    w_last = refs[idx][...]
    b_last = refs[idx + 1][...]
    o_ref = refs[idx + 2]
    o_ref[...] = (jnp.dot(h.astype(jnp.bfloat16), w_last.astype(jnp.bfloat16),
                          preferred_element_type=jnp.float32)
                  + b_last).astype(o_ref.dtype)


# ----------------------------- wrapper ----------------------------------------

_VMEM = pl.BlockSpec(memory_space=pltpu.MemorySpace.VMEM)
_SMEM = pl.BlockSpec(memory_space=pltpu.MemorySpace.SMEM)


def mlp2_forward(features, params, *, dropout_p, seed=0, eps=1e-5):
    """params: list of dicts; hidden layers need w,gamma,beta; last needs w,b.

    Single fused pallas_call, no grid: at these shapes everything (weights +
    activations) fits comfortably in VMEM, so there is one launch and one
    lane-dense HBM writeback total.
    # TODO(synk): if this MLP is applied to many independent batches, add a
    # leading grid axis (grid=(B,), dimension_semantics=("parallel",)) instead
    # of issuing many tiny pallas_calls.
    """
    n_hidden = len(params) - 1
    use_dropout = dropout_p > 0.0
    keep_prob = 1.0 - dropout_p

    n, d0 = features.shape
    n_p = _round_up(n, _SUBLANE)
    d0_p = _round_up(d0, _LANE)

    inputs = [jnp.asarray([seed], dtype=jnp.int32),
              _pad2(features, n_p, d0_p)]
    in_specs = [_SMEM, _VMEM]

    d_in_p = d0_p
    for i in range(n_hidden):
        p = params[i]
        d_out_p = _round_up(p["w"].shape[1], _LANE)
        inputs += [
            _pad2(p["w"], d_in_p, d_out_p),               # zero rows/cols: exact
            _pad2(p["gamma"].reshape(1, -1), 1, d_out_p),  # pad gamma = 0
            _pad2(p["beta"].reshape(1, -1), 1, d_out_p),   # pad beta  = 0
        ]
        in_specs += [_VMEM, _VMEM, _VMEM]
        d_in_p = d_out_p

    last = params[-1]
    d_out = last["w"].shape[1]
    d_out_p = _round_up(d_out, _LANE)
    inputs += [_pad2(last["w"], d_in_p, d_out_p),
               _pad2(last["b"].reshape(1, -1), 1, d_out_p)]
    in_specs += [_VMEM, _VMEM]

    kernel = functools.partial(
        _mlp2_kernel,
        n_hidden=n_hidden,
        keep_thresh24=int(round(dropout_p * (1 << 24))) if use_dropout else 0,
        keep_scale=float(1.0 / keep_prob) if use_dropout else 1.0,
        eps=eps,
        use_dropout=use_dropout,
        true_n=n,
        n_pad=n_p - n,
    )

    out = pl.pallas_call(
        kernel,
        out_shape=jax.ShapeDtypeStruct((n_p, d_out_p), jnp.float32),
        in_specs=in_specs,
        out_specs=_VMEM,
    )(*inputs)

    return out[:n, :d_out]   # slice the lane-dense padded slab back down


# ----------------------------- reference & init ------------------------------


def mlp2_reference(features, params, *, eps=1e-5):
    """Pure-JAX training-mode forward (dropout disabled), f32 everywhere."""
    h = features
    for i in range(len(params) - 1):
        p = params[i]
        z = h @ p["w"] + p["b"]
        mean = jnp.mean(z, axis=0, keepdims=True)
        var = jnp.mean((z - mean) ** 2, axis=0, keepdims=True)
        z = (z - mean) * jax.lax.rsqrt(var + eps) * p["gamma"] + p["beta"]
        h = jnp.maximum(z, 0.0)
    return h @ params[-1]["w"] + params[-1]["b"]


def init_params(key, hiddens):
    """Mirrors PyTorch defaults: Linear U(-1/sqrt(fan_in)); BN gamma=1, beta=0.

    Hidden-layer biases are created for fidelity but are NOT consumed by the
    kernel: the BatchNorm mean-subtraction cancels them in the forward pass.
    """
    params = []
    n_linear = len(hiddens) - 1
    for i in range(n_linear):
        d_in, d_out = hiddens[i], hiddens[i + 1]
        key, kw, kb = jax.random.split(key, 3)
        bound = 1.0 / jnp.sqrt(d_in)
        w = jax.random.uniform(kw, (d_in, d_out), jnp.float32, -bound, bound)
        b = jax.random.uniform(kb, (d_out,), jnp.float32, -bound, bound)
        layer = {"w": w, "b": b}
        if i != n_linear - 1:
            layer["gamma"] = jnp.ones((d_out,), jnp.float32)
            layer["beta"] = jnp.zeros((d_out,), jnp.float32)
        params.append(layer)
    return params


# ----------------------------- main ------------------------------------------

if __name__ == "__main__":
    hiddens = [16, 32, 32, 8]   # MLP2(hiddens, activation=ReLU, dropout=0.5)
    dropout_p = 0.5
    batch = 8

    key = jax.random.PRNGKey(0)
    key, kx = jax.random.split(key)
    features = jax.random.normal(kx, (batch, hiddens[0]), jnp.float32)

    params = init_params(key, hiddens)

    # Correctness check with dropout disabled (deterministic path); loose tol
    # because the kernel uses bf16 MXU operands while the reference is f32.
    got = jax.block_until_ready(mlp2_forward(features, params, dropout_p=0.0))
    want = mlp2_reference(features, params)
    assert got.shape == want.shape
    assert bool(jnp.allclose(got, want, atol=5e-2, rtol=5e-2))

    # Training-mode run with dropout.
    logits = mlp2_forward(features, params, dropout_p=dropout_p, seed=1234)
    logits = jax.block_until_ready(logits)

    assert logits.shape == (batch, hiddens[-1])
    assert bool(jnp.all(jnp.isfinite(logits)))
    print("KERNEL_OK")
</pallas_src>

<mosaic_0001>
module attributes {stable_mosaic.version = 11 : i64} {
  func.func @_mlp2_kernel(%arg0: memref<1xi32, #tpu.memory_space<smem>>, %arg1: memref<8x128xf32, #tpu.memory_space<vmem>>, %arg2: memref<128x128xf32, #tpu.memory_space<vmem>>, %arg3: memref<1x128xf32, #tpu.memory_space<vmem>>, %arg4: memref<1x128xf32, #tpu.memory_space<vmem>>, %arg5: memref<128x128xf32, #tpu.memory_space<vmem>>, %arg6: memref<1x128xf32, #tpu.memory_space<vmem>>, %arg7: memref<1x128xf32, #tpu.memory_space<vmem>>, %arg8: memref<128x128xf32, #tpu.memory_space<vmem>>, %arg9: memref<1x128xf32, #tpu.memory_space<vmem>>, %arg10: memref<8x128xf32, #tpu.memory_space<vmem>>) attributes {dimension_semantics = [], scalar_prefetch = 0 : i64, scratch_operands = 0 : i64, tpu.core_type = #tpu.core_type<tc>} {
    %c0 = arith.constant 0 : index
    %c0_0 = arith.constant 0 : index
    %0 = vector.load %arg1[%c0, %c0_0] : memref<8x128xf32, #tpu.memory_space<vmem>>, vector<8x128xf32>
    %c0_1 = arith.constant 0 : index
    %c0_2 = arith.constant 0 : index
    %1 = vector.load %arg2[%c0_1, %c0_2] : memref<128x128xf32, #tpu.memory_space<vmem>>, vector<128x128xf32>
    %c0_3 = arith.constant 0 : index
    %c0_4 = arith.constant 0 : index
    %2 = vector.load %arg3[%c0_3, %c0_4] : memref<1x128xf32, #tpu.memory_space<vmem>>, vector<1x128xf32>
    %c0_5 = arith.constant 0 : index
    %c0_6 = arith.constant 0 : index
    %3 = vector.load %arg4[%c0_5, %c0_6] : memref<1x128xf32, #tpu.memory_space<vmem>>, vector<1x128xf32>
    %4 = arith.truncf %0 : vector<8x128xf32> to vector<8x128xbf16>
    %5 = arith.truncf %1 : vector<128x128xf32> to vector<128x128xbf16>
    %cst = arith.constant dense<0.000000e+00> : vector<8x128xf32>
    %6 = tpu.matmul %4, %5, %cst {dimension_numbers = #tpu.dot_dimension_numbers<[1], [0], [0], [1], [0, 0, 1, 1], [], []>} : vector<8x128xbf16>, vector<128x128xbf16>, vector<8x128xf32> -> vector<8x128xf32>
    %cst_7 = arith.constant dense<0.000000e+00> : vector<128xf32>
    %7 = vector.multi_reduction <add>, %6, %cst_7 [0] : vector<8x128xf32> to vector<128xf32>
    %8 = vector.shape_cast %7 : vector<128xf32> to vector<1x128xf32>
    %cst_8 = arith.constant 1.250000e-01 : f32
    %9 = vector.broadcast %cst_8 : f32 to vector<1x128xf32>
    %10 = arith.mulf %8, %9 : vector<1x128xf32>
    %11 = vector.broadcast %10 : vector<1x128xf32> to vector<8x128xf32>
    %12 = arith.subf %6, %11 : vector<8x128xf32>
    %13 = arith.mulf %12, %12 : vector<8x128xf32>
    %cst_9 = arith.constant dense<0.000000e+00> : vector<128xf32>
    %14 = vector.multi_reduction <add>, %13, %cst_9 [0] : vector<8x128xf32> to vector<128xf32>
    %15 = vector.shape_cast %14 : vector<128xf32> to vector<1x128xf32>
    %cst_10 = arith.constant 1.250000e-01 : f32
    %16 = vector.broadcast %cst_10 : f32 to vector<1x128xf32>
    %17 = arith.mulf %15, %16 : vector<1x128xf32>
    %cst_11 = arith.constant 9.99999974E-6 : f32
    %18 = vector.broadcast %cst_11 : f32 to vector<1x128xf32>
    %19 = arith.addf %17, %18 : vector<1x128xf32>
    %20 = math.rsqrt %19 : vector<1x128xf32>
    %21 = arith.mulf %2, %20 : vector<1x128xf32>
    %22 = vector.broadcast %21 : vector<1x128xf32> to vector<8x128xf32>
    %23 = arith.mulf %12, %22 : vector<8x128xf32>
    %24 = vector.broadcast %3 : vector<1x128xf32> to vector<8x128xf32>
    %25 = arith.addf %23, %24 : vector<8x128xf32>
    %cst_12 = arith.constant 0.000000e+00 : f32
    %26 = vector.broadcast %cst_12 : f32 to vector<8x128xf32>
    %27 = arith.maximumf %25, %26 : vector<8x128xf32>
    %c0_13 = arith.constant 0 : index
    %c0_14 = arith.constant 0 : index
    %28 = vector.load %arg5[%c0_13, %c0_14] : memref<128x128xf32, #tpu.memory_space<vmem>>, vector<128x128xf32>
    %c0_15 = arith.constant 0 : index
    %c0_16 = arith.constant 0 : index
    %29 = vector.load %arg6[%c0_15, %c0_16] : memref<1x128xf32, #tpu.memory_space<vmem>>, vector<1x128xf32>
    %c0_17 = arith.constant 0 : index
    %c0_18 = arith.constant 0 : index
    %30 = vector.load %arg7[%c0_17, %c0_18] : memref<1x128xf32, #tpu.memory_space<vmem>>, vector<1x128xf32>
    %31 = arith.truncf %27 : vector<8x128xf32> to vector<8x128xbf16>
    %32 = arith.truncf %28 : vector<128x128xf32> to vector<128x128xbf16>
    %cst_19 = arith.constant dense<0.000000e+00> : vector<8x128xf32>
    %33 = tpu.matmul %31, %32, %cst_19 {dimension_numbers = #tpu.dot_dimension_numbers<[1], [0], [0], [1], [0, 0, 1, 1], [], []>} : vector<8x128xbf16>, vector<128x128xbf16>, vector<8x128xf32> -> vector<8x128xf32>
    %cst_20 = arith.constant dense<0.000000e+00> : vector<128xf32>
    %34 = vector.multi_reduction <add>, %33, %cst_20 [0] : vector<8x128xf32> to vector<128xf32>
    %35 = vector.shape_cast %34 : vector<128xf32> to vector<1x128xf32>
    %cst_21 = arith.constant 1.250000e-01 : f32
    %36 = vector.broadcast %cst_21 : f32 to vector<1x128xf32>
    %37 = arith.mulf %35, %36 : vector<1x128xf32>
    %38 = vector.broadcast %37 : vector<1x128xf32> to vector<8x128xf32>
    %39 = arith.subf %33, %38 : vector<8x128xf32>
    %40 = arith.mulf %39, %39 : vector<8x128xf32>
    %cst_22 = arith.constant dense<0.000000e+00> : vector<128xf32>
    %41 = vector.multi_reduction <add>, %40, %cst_22 [0] : vector<8x128xf32> to vector<128xf32>
    %42 = vector.shape_cast %41 : vector<128xf32> to vector<1x128xf32>
    %cst_23 = arith.constant 1.250000e-01 : f32
    %43 = vector.broadcast %cst_23 : f32 to vector<1x128xf32>
    %44 = arith.mulf %42, %43 : vector<1x128xf32>
    %cst_24 = arith.constant 9.99999974E-6 : f32
    %45 = vector.broadcast %cst_24 : f32 to vector<1x128xf32>
    %46 = arith.addf %44, %45 : vector<1x128xf32>
    %47 = math.rsqrt %46 : vector<1x128xf32>
    %48 = arith.mulf %29, %47 : vector<1x128xf32>
    %49 = vector.broadcast %48 : vector<1x128xf32> to vector<8x128xf32>
    %50 = arith.mulf %39, %49 : vector<8x128xf32>
    %51 = vector.broadcast %30 : vector<1x128xf32> to vector<8x128xf32>
    %52 = arith.addf %50, %51 : vector<8x128xf32>
    %cst_25 = arith.constant 0.000000e+00 : f32
    %53 = vector.broadcast %cst_25 : f32 to vector<8x128xf32>
    %54 = arith.maximumf %52, %53 : vector<8x128xf32>
    %c0_26 = arith.constant 0 : index
    %c0_27 = arith.constant 0 : index
    %55 = vector.load %arg8[%c0_26, %c0_27] : memref<128x128xf32, #tpu.memory_space<vmem>>, vector<128x128xf32>
    %c0_28 = arith.constant 0 : index
    %c0_29 = arith.constant 0 : index
    %56 = vector.load %arg9[%c0_28, %c0_29] : memref<1x128xf32, #tpu.memory_space<vmem>>, vector<1x128xf32>
    %57 = arith.truncf %54 : vector<8x128xf32> to vector<8x128xbf16>
    %58 = arith.truncf %55 : vector<128x128xf32> to vector<128x128xbf16>
    %cst_30 = arith.constant dense<0.000000e+00> : vector<8x128xf32>
    %59 = tpu.matmul %57, %58, %cst_30 {dimension_numbers = #tpu.dot_dimension_numbers<[1], [0], [0], [1], [0, 0, 1, 1], [], []>} : vector<8x128xbf16>, vector<128x128xbf16>, vector<8x128xf32> -> vector<8x128xf32>
    %60 = vector.broadcast %56 : vector<1x128xf32> to vector<8x128xf32>
    %61 = arith.addf %59, %60 : vector<8x128xf32>
    %c0_31 = arith.constant 0 : index
    %c0_32 = arith.constant 0 : index
    %62 = vector.load %arg10[%c0_31, %c0_32] : memref<8x128xf32, #tpu.memory_space<vmem>>, vector<8x128xf32>
    tpu.vector_store %arg10[%c0_31, %c0_32], %61 {strides = array<i32>} : memref<8x128xf32, #tpu.memory_space<vmem>>, vector<8x128xf32>,
    return
  }
}

</mosaic_0001>

<llo_original>
// kernel: tpu_custom_call.1
$region0: #{tpu_custom_call.1}
  #allocation0 [shape = 'u32[]', space=smem, size = 0x4, offset = 0x4, fixed_abs, tag = 'smem constant byte address 0x4 - core index']
  #allocation1 [shape = 'u32[72,128]{1,0:T(1,128)}', space=vmem, size = 0x9000, scoped, tag = 'internal scratch']
  #allocation2 [shape = 's32[1]{0:T(128)S(6)}', space=smem, size = 0x200, scoped, tag = 'scoped memory for tpu_custom_call.1']
  %s0 = inlined_call_operand.<no memory space> [shape: s32[1], index: 0, kind: input, shape index: {}]
  %s1 = inlined_call_operand.hbm [shape: f32[8,128], index: 1, kind: input, shape index: {}]
  %s2 = inlined_call_operand.hbm [shape: f32[128,128], index: 2, kind: input, shape index: {}]
  %s3 = inlined_call_operand.vmem [shape: f32[1,128], index: 3, kind: input, shape index: {}]
  %s4 = inlined_call_operand.vmem [shape: f32[1,128], index: 4, kind: input, shape index: {}]
  %s5 = inlined_call_operand.hbm [shape: f32[128,128], index: 5, kind: input, shape index: {}]
  %s6 = inlined_call_operand.vmem [shape: f32[1,128], index: 6, kind: input, shape index: {}]
  %s7 = inlined_call_operand.vmem [shape: f32[1,128], index: 7, kind: input, shape index: {}]
  %s8 = inlined_call_operand.hbm [shape: f32[128,128], index: 8, kind: input, shape index: {}]
  %s9 = inlined_call_operand.vmem [shape: f32[1,128], index: 9, kind: input, shape index: {}]
  %s10 = inlined_call_operand.hbm [shape: f32[8,128], index: 10, kind: output, shape index: {}]
  %s11 = sld [smem:[#allocation0]]
  $region66: #{tpu_custom_call.1} parent=0
    _
  %s13 = ssub.s32 1, %s11
  %s14 = scalar_select 0, %s13, %s11
  %15 = sst [smem:[#allocation2]] %s0
  $region1: #{tpu_custom_call.1} parent=0
    #allocation3 [shape = 'u8[4096]{0}', space=vmem, size = 0x1000, scoped, tag = 'input window, operand 1, single buffered']
    #allocation4 [shape = 's32[1]{0}', space=sflag, size = 0x4, scoped, tag = 'scoped memory for tpu_custom_call.1']
    #allocation5 [shape = 's32[1]{0}', space=sflag, size = 0x4, scoped, tag = 'scoped memory for tpu_custom_call.1']
    #allocation6 [shape = 'u8[65536]{0}', space=vmem, size = 0x10000, scoped, tag = 'input window, operand 2, single buffered']
    #allocation7 [shape = 's32[1]{0}', space=sflag, size = 0x4, scoped, tag = 'scoped memory for tpu_custom_call.1']
    #allocation8 [shape = 'u8[65536]{0}', space=vmem, size = 0x10000, scoped, tag = 'input window, operand 5, single buffered']
    #allocation9 [shape = 'u8[65536]{0}', space=vmem, size = 0x10000, scoped, tag = 'input window, operand 8, single buffered']
    #allocation10 [shape = 's32[1]{0}', space=sflag, size = 0x4, scoped, tag = 'scoped memory for tpu_custom_call.1']
    #allocation11 [shape = 'u8[4096]{0}', space=vmem, size = 0x1000, scoped, tag = 'output window, operand 0, single buffered']
    %16 = vsyncpa [#allocation4], 0
    %17 = vsyncpa [#allocation7], 0
    %18 = vsyncpa [#allocation10], 0
    %19 = vsyncpa [#allocation5], 0
    // Predicated region
    $region2: #{tpu_custom_call.1} parent=1 // pred_check
      _
    $region3: #{tpu_custom_call.1} parent=1 // pred_check_branch
      %21 = sbr.rel (0) target = $region5
    $region4: #{tpu_custom_call.1} parent=1 // pred_region
      _
    $region5: #{tpu_custom_call.1} parent=1 // pred_fallthru
      _
    // Predicated region
    $region6: #{tpu_custom_call.1} parent=1 // pred_check
      _
    $region7: #{tpu_custom_call.1} parent=1 // pred_check_branch
      %23 = sbr.rel (0) target = $region9
    $region8: #{tpu_custom_call.1} parent=1 // pred_region
      %25 = vsyncadd [#allocation4], 0
      %s27 = sshll.u32 %s1, 4
      %s28 = int_to_ptr.hbm [resolvable:$true] %s27
      %s29 = sshll.u32 [#allocation3], 4
      %s30 = int_to_ptr.vmem [resolvable:$true] %s29
      %32 = dma.hbm_to_vmem [thread:$0]  %s28, 128, %s30, [#allocation4]
    $region9: #{tpu_custom_call.1} parent=1 // pred_fallthru
      _
    // Predicated region
    $region10: #{tpu_custom_call.1} parent=1 // pred_check
      _
    $region11: #{tpu_custom_call.1} parent=1 // pred_check_branch
      %34 = sbr.rel (0) target = $region13
    $region12: #{tpu_custom_call.1} parent=1 // pred_region
      %36 = vsyncadd [#allocation7], 0
      %s37 = sshll.u32 %s2, 4
      %s38 = int_to_ptr.hbm [resolvable:$true] %s37
      %s39 = sshll.u32 [#allocation6], 4
      %s40 = int_to_ptr.vmem [resolvable:$true] %s39
      %45 = dma.hbm_to_vmem [thread:$0]  %s38, 2048, %s40, [#allocation7], 128, 128, 8
    $region13: #{tpu_custom_call.1} parent=1 // pred_fallthru
      _
    // Predicated region
    $region14: #{tpu_custom_call.1} parent=1 // pred_check
      _
    $region15: #{tpu_custom_call.1} parent=1 // pred_check_branch
      %47 = sbr.rel (0) target = $region17
    $region16: #{tpu_custom_call.1} parent=1 // pred_region
      _
    $region17: #{tpu_custom_call.1} parent=1 // pred_fallthru
      _
    // Predicated region
    $region18: #{tpu_custom_call.1} parent=1 // pred_check
      _
    $region19: #{tpu_custom_call.1} parent=1 // pred_check_branch
      %49 = sbr.rel (0) target = $region21
    $region20: #{tpu_custom_call.1} parent=1 // pred_region
      _
    $region21: #{tpu_custom_call.1} parent=1 // pred_fallthru
      _
    // Predicated region
    $region22: #{tpu_custom_call.1} parent=1 // pred_check
      _
    $region23: #{tpu_custom_call.1} parent=1 // pred_check_branch
      %51 = sbr.rel (0) target = $region25
    $region24: #{tpu_custom_call.1} parent=1 // pred_region
      %53 = vsyncadd [#allocation7], 0
      %s54 = sshll.u32 %s5, 4
      %s55 = int_to_ptr.hbm [resolvable:$true] %s54
      %s56 = sshll.u32 [#allocation8], 4
      %s57 = int_to_ptr.vmem [resolvable:$true] %s56
      %62 = dma.hbm_to_vmem [thread:$0]  %s55, 2048, %s57, [#allocation7], 128, 128, 8
    $region25: #{tpu_custom_call.1} parent=1 // pred_fallthru
      _
    // Predicated region
    $region26: #{tpu_custom_call.1} parent=1 // pred_check
      _
    $region27: #{tpu_custom_call.1} parent=1 // pred_check_branch
      %64 = sbr.rel (0) target = $region29
    $region28: #{tpu_custom_call.1} parent=1 // pred_region
      _
    $region29: #{tpu_custom_call.1} parent=1 // pred_fallthru
      _
    // Predicated region
    $region30: #{tpu_custom_call.1} parent=1 // pred_check
      _
    $region31: #{tpu_custom_call.1} parent=1 // pred_check_branch
      %66 = sbr.rel (0) target = $region33
    $region32: #{tpu_custom_call.1} parent=1 // pred_region
      _
    $region33: #{tpu_custom_call.1} parent=1 // pred_fallthru
      _
    // Predicated region
    $region34: #{tpu_custom_call.1} parent=1 // pred_check
      _
    $region35: #{tpu_custom_call.1} parent=1 // pred_check_branch
      %68 = sbr.rel (0) target = $region37
    $region36: #{tpu_custom_call.1} parent=1 // pred_region
      %70 = vsyncadd [#allocation10], 0
      %s71 = sshll.u32 %s8, 4
      %s72 = int_to_ptr.hbm [resolvable:$true] %s71
      %s73 = sshll.u32 [#allocation9], 4
      %s74 = int_to_ptr.vmem [resolvable:$true] %s73
      %79 = dma.hbm_to_vmem [thread:$0]  %s72, 2048, %s74, [#allocation10], 128, 128, 8
    $region37: #{tpu_custom_call.1} parent=1 // pred_fallthru
      _
    // Predicated region
    $region38: #{tpu_custom_call.1} parent=1 // pred_check
      _
    $region39: #{tpu_custom_call.1} parent=1 // pred_check_branch
      %81 = sbr.rel (0) target = $region41
    $region40: #{tpu_custom_call.1} parent=1 // pred_region
      _
    $region41: #{tpu_custom_call.1} parent=1 // pred_fallthru
      _
    // Predicated region
    $region42: #{tpu_custom_call.1} parent=1 // pred_check
      _
    $region43: #{tpu_custom_call.1} parent=1 // pred_check_branch
      %83 = sbr.rel (0) target = $region45
    $region44: #{tpu_custom_call.1} parent=1 // pred_region
      %85 = dma.done [#allocation4], 128
    $region45: #{tpu_custom_call.1} parent=1 // pred_fallthru
      _
    // Predicated region
    $region46: #{tpu_custom_call.1} parent=1 // pred_check
      _
    $region47: #{tpu_custom_call.1} parent=1 // pred_check_branch
      %87 = sbr.rel (0) target = $region49
    $region48: #{tpu_custom_call.1} parent=1 // pred_region
      %89 = dma.done [#allocation7], 2048
    $region49: #{tpu_custom_call.1} parent=1 // pred_fallthru
      _
    // Predicated region
    $region50: #{tpu_custom_call.1} parent=1 // pred_check
      _
    $region51: #{tpu_custom_call.1} parent=1 // pred_check_branch
      %91 = sbr.rel (0) target = $region53
    $region52: #{tpu_custom_call.1} parent=1 // pred_region
      %93 = dma.done [#allocation7], 2048
    $region53: #{tpu_custom_call.1} parent=1 // pred_fallthru
      _
    // Predicated region
    $region54: #{tpu_custom_call.1} parent=1 // pred_check
      _
    $region55: #{tpu_custom_call.1} parent=1 // pred_check_branch
      %95 = sbr.rel (0) target = $region57
    $region56: #{tpu_custom_call.1} parent=1 // pred_region
      %97 = dma.done [#allocation10], 2048
    $region57: #{tpu_custom_call.1} parent=1 // pred_fallthru
      _
    %v98 = vld [vmem:[#allocation3] sm:$0xff]
    %v99 = vld [vmem:[#allocation6] sm:$0xff]
    %v100 = vld [vmem:[#allocation6 + $0x8] sm:$0xff]
    %v101 = vld [vmem:[#allocation6 + $0x10] sm:$0xff]
    %v102 = vld [vmem:[#allocation6 + $0x18] sm:$0xff]
    %v103 = vld [vmem:[#allocation6 + $0x20] sm:$0xff]
    %v104 = vld [vmem:[#allocation6 + $0x28] sm:$0xff]
    %v105 = vld [vmem:[#allocation6 + $0x30] sm:$0xff]
    %v106 = vld [vmem:[#allocation6 + $0x38] sm:$0xff]
    %v107 = vld [vmem:[#allocation6 + $0x40] sm:$0xff]
    %v108 = vld [vmem:[#allocation6 + $0x48] sm:$0xff]
    %v109 = vld [vmem:[#allocation6 + $0x50] sm:$0xff]
    %v110 = vld [vmem:[#allocation6 + $0x58] sm:$0xff]
    %v111 = vld [vmem:[#allocation6 + $0x60] sm:$0xff]
    %v112 = vld [vmem:[#allocation6 + $0x68] sm:$0xff]
    %v113 = vld [vmem:[#allocation6 + $0x70] sm:$0xff]
    %v114 = vld [vmem:[#allocation6 + $0x78] sm:$0xff]
    %v115 = vld [vmem:[%s3] sm:$0x1]
    %v116 = vld [vmem:[%s4] sm:$0x1]
    %v117 = vpack.c.bf16 %v98, %v98
    %v118 = vpack.c.bf16 %v100, %v99
    %v119 = vpack.c.bf16 %v102, %v101
    %v120 = vpack.c.bf16 %v104, %v103
    %v121 = vpack.c.bf16 %v106, %v105
    %v122 = vpack.c.bf16 %v108, %v107
    %v123 = vpack.c.bf16 %v110, %v109
    %v124 = vpack.c.bf16 %v112, %v111
    %v125 = vpack.c.bf16 %v114, %v113
    %126 = vmatpush.bf16.msra.mxu0 %v125
    %127 = vmatpush.bf16.msra.mxu0 %v124
    %128 = vmatpush.bf16.msra.mxu0 %v123
    %129 = vmatpush.bf16.msra.mxu0 %v122
    %130 = vmatpush.bf16.msra.mxu0 %v121
    %131 = vmatpush.bf16.msra.mxu0 %v120
    %132 = vmatpush.bf16.msra.mxu0 %v119
    %133 = vmatpush.bf16.msra.mxu0 %v118
    %134 = vmatmul.bf16.gmra.mxu0 %v117
    %v135 = vpop.f32.mrf.mxu0
    %v136 = vadd.f32 0.0, %v135
    %v137 = vpop.f32.mrf.mxu0
    %138 = vdwg.mxu0
    %v139 = vrot.slane %v136, 4
    %v140 = vadd.f32 %v136, %v139
    %v141 = vrot.slane %v140, 2
    %v142 = vadd.f32 %v140, %v141
    %v143 = vrot.slane %v142, 1
    %v144 = vadd.f32 %v142, %v143
    %v145 = vmul.f32 %v144, 0.125
    %v146 = vsub.f32 %v136, %v145
    %v147 = vmul.f32 %v146, %v146
    %v148 = vrot.slane %v147, 4
    %v149 = vadd.f32 %v147, %v148
    %v150 = vrot.slane %v149, 2
    %v151 = vadd.f32 %v149, %v150
    %v152 = vrot.slane %v151, 1
    %v153 = vadd.f32 %v151, %v152
    %v154 = vmul.f32 %v153, 0.125
    %v155 = vadd.f32 %v154, 1e-05
    %v156 = vrsqrt.pop %v155
    %v157 = vmul.f32 %v156, %v155
    %v158 = vmul.f32 %v157, %v156
    %v159 = vmul.f32 0.5, %v158
    %v160 = vsub.f32 1.5, %v159
    %v161 = vmul.f32 %v156, %v160
    %vm162 = vweird.f32 %v155
    %vm163 = vweird.f32 %v156
    %vm164 = vmor %vm162, %vm163
    %v165 = vsel %vm164, %v156, %v161
    %v166 = vmul.f32 %v115, %v165
    %v168 = vperm.slane %v166, 0
    %v170 = vmul.f32 %v146, %v168
    %v172 = vperm.slane %v116, 0
    %v174 = vadd.f32 %v170, %v172
    %v175 = vmax.f32 %v174, 0.0
    %v176 = vld [vmem:[#allocation8] sm:$0xff]
    %v177 = vld [vmem:[#allocation8 + $0x8] sm:$0xff]
    %v178 = vld [vmem:[#allocation8 + $0x10] sm:$0xff]
    %v179 = vld [vmem:[#allocation8 + $0x18] sm:$0xff]
    %v180 = vld [vmem:[#allocation8 + $0x20] sm:$0xff]
    %v181 = vld [vmem:[#allocation8 + $0x28] sm:$0xff]
    %v182 = vld [vmem:[#allocation8 + $0x30] sm:$0xff]
    %v183 = vld [vmem:[#allocation8 + $0x38] sm:$0xff]
    %v184 = vld [vmem:[#allocation8 + $0x40] sm:$0xff]
    %v185 = vld [vmem:[#allocation8 + $0x48] sm:$0xff]
    %v186 = vld [vmem:[#allocation8 + $0x50] sm:$0xff]
    %v187 = vld [vmem:[#allocation8 + $0x58] sm:$0xff]
    %v188 = vld [vmem:[#allocation8 + $0x60] sm:$0xff]
    %v189 = vld [vmem:[#allocation8 + $0x68] sm:$0xff]
    %v190 = vld [vmem:[#allocation8 + $0x70] sm:$0xff]
    %v191 = vld [vmem:[#allocation8 + $0x78] sm:$0xff]
    %v192 = vld [vmem:[%s6] sm:$0x1]
    %v193 = vld [vmem:[%s7] sm:$0x1]
    %v194 = vpack.c.bf16 %v175, %v175
    %v195 = vpack.c.bf16 %v177, %v176
    %v196 = vpack.c.bf16 %v179, %v178
    %v197 = vpack.c.bf16 %v181, %v180
    %v198 = vpack.c.bf16 %v183, %v182
    %v199 = vpack.c.bf16 %v185, %v184
    %v200 = vpack.c.bf16 %v187, %v186
    %v201 = vpack.c.bf16 %v189, %v188
    %v202 = vpack.c.bf16 %v191, %v190
    %203 = vmatpush.bf16.msra.mxu0 %v202
    %204 = vmatpush.bf16.msra.mxu0 %v201
    %205 = vmatpush.bf16.msra.mxu0 %v200
    %206 = vmatpush.bf16.msra.mxu0 %v199
    %207 = vmatpush.bf16.msra.mxu0 %v198
    %208 = vmatpush.bf16.msra.mxu0 %v197
    %209 = vmatpush.bf16.msra.mxu0 %v196
    %210 = vmatpush.bf16.msra.mxu0 %v195
    %211 = vmatmul.bf16.gmra.mxu0 %v194
    %v212 = vpop.f32.mrf.mxu0
    %v213 = vadd.f32 0.0, %v212
    %v214 = vpop.f32.mrf.mxu0
    %215 = vdwg.mxu0
    %v216 = vrot.slane %v213, 4
    %v217 = vadd.f32 %v213, %v216
    %v218 = vrot.slane %v217, 2
    %v219 = vadd.f32 %v217, %v218
    %v220 = vrot.slane %v219, 1
    %v221 = vadd.f32 %v219, %v220
    %v222 = vmul.f32 %v221, 0.125
    %v223 = vsub.f32 %v213, %v222
    %v224 = vmul.f32 %v223, %v223
    %v225 = vrot.slane %v224, 4
    %v226 = vadd.f32 %v224, %v225
    %v227 = vrot.slane %v226, 2
    %v228 = vadd.f32 %v226, %v227
    %v229 = vrot.slane %v228, 1
    %v230 = vadd.f32 %v228, %v229
    %v231 = vmul.f32 %v230, 0.125
    %v232 = vadd.f32 %v231, 1e-05
    %v233 = vrsqrt.pop %v232
    %v234 = vmul.f32 %v233, %v232
    %v235 = vmul.f32 %v234, %v233
    %v236 = vmul.f32 0.5, %v235
    %v237 = vsub.f32 1.5, %v236
    %v238 = vmul.f32 %v233, %v237
    %vm239 = vweird.f32 %v232
    %vm240 = vweird.f32 %v233
    %vm241 = vmor %vm239, %vm240
    %v242 = vsel %vm241, %v233, %v238
    %v243 = vmul.f32 %v192, %v242
    %v245 = vperm.slane %v243, 0
    %v247 = vmul.f32 %v223, %v245
    %v249 = vperm.slane %v193, 0
    %v251 = vadd.f32 %v247, %v249
    %v252 = vmax.f32 %v251, 0.0
    %v253 = vld [vmem:[#allocation9] sm:$0xff]
    %v254 = vld [vmem:[#allocation9 + $0x8] sm:$0xff]
    %v255 = vld [vmem:[#allocation9 + $0x10] sm:$0xff]
    %v256 = vld [vmem:[#allocation9 + $0x18] sm:$0xff]
    %v257 = vld [vmem:[#allocation9 + $0x20] sm:$0xff]
    %v258 = vld [vmem:[#allocation9 + $0x28] sm:$0xff]
    %v259 = vld [vmem:[#allocation9 + $0x30] sm:$0xff]
    %v260 = vld [vmem:[#allocation9 + $0x38] sm:$0xff]
    %v261 = vld [vmem:[#allocation9 + $0x40] sm:$0xff]
    %v262 = vld [vmem:[#allocation9 + $0x48] sm:$0xff]
    %v263 = vld [vmem:[#allocation9 + $0x50] sm:$0xff]
    %v264 = vld [vmem:[#allocation9 + $0x58] sm:$0xff]
    %v265 = vld [vmem:[#allocation9 + $0x60] sm:$0xff]
    %v266 = vld [vmem:[#allocation9 + $0x68] sm:$0xff]
    %v267 = vld [vmem:[#allocation9 + $0x70] sm:$0xff]
    %v268 = vld [vmem:[#allocation9 + $0x78] sm:$0xff]
    %v269 = vld [vmem:[%s9] sm:$0x1]
    %v270 = vpack.c.bf16 %v252, %v252
    %v271 = vpack.c.bf16 %v254, %v253
    %v272 = vpack.c.bf16 %v256, %v255
    %v273 = vpack.c.bf16 %v258, %v257
    %v274 = vpack.c.bf16 %v260, %v259
    %v275 = vpack.c.bf16 %v262, %v261
    %v276 = vpack.c.bf16 %v264, %v263
    %v277 = vpack.c.bf16 %v266, %v265
    %v278 = vpack.c.bf16 %v268, %v267
    %v280 = vperm.slane %v269, 0
    %282 = vmatpush.bf16.msra.mxu0 %v278
    %283 = vmatpush.bf16.msra.mxu0 %v277
    %284 = vmatpush.bf16.msra.mxu0 %v276
    %285 = vmatpush.bf16.msra.mxu0 %v275
    %286 = vmatpush.bf16.msra.mxu0 %v274
    %287 = vmatpush.bf16.msra.mxu0 %v273
    %288 = vmatpush.bf16.msra.mxu0 %v272
    %289 = vmatpush.bf16.msra.mxu0 %v271
    %290 = vmatmul.bf16.gmra.mxu0 %v270
    %v291 = vpop.f32.mrf.mxu0
    %v292 = vadd.f32 %v280, %v291
    %v293 = vpop.f32.mrf.mxu0
    %294 = vdwg.mxu0
    %295 = vst [vmem:[#allocation11] sm:$0xff] %v292
    // Predicated region
    $region58: #{tpu_custom_call.1} parent=1 // pred_check
      _
    $region59: #{tpu_custom_call.1} parent=1 // pred_check_branch
      %297 = sbr.rel (0) target = $region61
    $region60: #{tpu_custom_call.1} parent=1 // pred_region
      %299 = vsyncadd [#allocation5], 0
      %s301 = sshll.u32 [#allocation11], 4
      %s302 = int_to_ptr.vmem [resolvable:$true] %s301
      %s303 = sshll.u32 %s10, 4
      %s304 = int_to_ptr.hbm [resolvable:$true] %s303
      %306 = dma.vmem_to_hbm [thread:$0]  %s302, 128, %s304, [#allocation5]
    $region61: #{tpu_custom_call.1} parent=1 // pred_fallthru
      _
    // Predicated region
    $region62: #{tpu_custom_call.1} parent=1 // pred_check
      _
    $region63: #{tpu_custom_call.1} parent=1 // pred_check_branch
      %308 = sbr.rel (0) target = $region65
    $region64: #{tpu_custom_call.1} parent=1 // pred_region
      %310 = dma.done [#allocation5], 128
    $region65: #{tpu_custom_call.1} parent=1 // pred_fallthru
      _
    %311 = vsyncpa [#allocation4], 1
    %312 = vsyncpa [#allocation7], 1
    %313 = vsyncpa [#allocation10], 1
    %314 = vsyncpa [#allocation5], 1

</llo_original>
